<compile_context>
chip_gen: v5e
topology: v5e:2x2
jax: 0.10.0
libtpu: 0.0.40
codegen_flags: <defaults>
</compile_context>

<pallas_src>
import jax
import jax.numpy as jnp
from jax.experimental import pallas as pl
from jax.experimental.pallas import tpu as pltpu

# Real (unpadded) layer widths from the PyTorch module (n = 200).
N1, N2, N3 = 200, 100, 50
_LANE = 128


def _round_up(x, m):
    return ((x + m - 1) // m) * m


def three_dense_kernel(x_ref, w1_ref, b1_ref, w2_ref, b2_ref, w3_ref, b3_ref, o_ref):
    # fc1 + relu: bf16 operands feed the MXU, accumulation / epilogue in f32.
    h1 = jnp.dot(x_ref[...], w1_ref[...], preferred_element_type=jnp.float32)
    h1 = jnp.maximum(h1 + b1_ref[...], 0.0)
    # fc2 + relu  (h2 is (TB, 128))
    h2 = jnp.dot(h1.astype(jnp.bfloat16), w2_ref[...], preferred_element_type=jnp.float32)
    h2 = jnp.maximum(h2 + b2_ref[...], 0.0)
    # fc3 + sigmoid  (h3 is (TB, 128); padded output columns sliced off in the wrapper)
    h3 = jnp.dot(h2.astype(jnp.bfloat16), w3_ref[...], preferred_element_type=jnp.float32)
    h3 = h3 + b3_ref[...]
    # Exact sigmoid: exp lands on the EUP; the f32 divide over 128 lanes is cheap
    # and keeps outputs in [0, 1] / matching torch.sigmoid.
    o_ref[...] = (1.0 / (1.0 + jnp.exp(-h3))).astype(o_ref.dtype)


def _choose_tb(B, in_dim_p, *, max_tb=1024, tile_budget_bytes=16 << 20):
    """Batch-tile rows: VMEM-budget-derived, multiple of 16 (bf16 sublane pack),
    and capped so the grid has >= 2 steps (v7x megacore) whenever B allows it."""
    per_row = (
        2 * in_dim_p * 2          # x tile, bf16, double-buffered
        + 2 * _LANE * 4           # out tile, f32, double-buffered
        + (256 + 128 + 128) * 4   # h1/h2/h3 live f32 temporaries
    )
    tb_budget = max(16, (tile_budget_bytes // per_row) // 16 * 16)
    tb_two_steps = max(16, _round_up(pl.cdiv(B, 2), 16))
    return min(max_tb, tb_budget, tb_two_steps)


@jax.jit
def three_dense_net(x, params):
    """x: (B, input_dim) float32.  params: dict of bf16 weights / f32 biases
    (feature dims zero-padded to multiples of 128).  Returns (B, 50) f32 in [0, 1]."""
    w1, b1 = params["w1"], params["b1"]
    w2, b2 = params["w2"], params["b2"]
    w3, b3 = params["w3"], params["b3"]
    B, in_dim = x.shape
    in_dim_p = w1.shape[0]        # padded K of layer 1 (== in_dim for small in_dim)
    n3_pad = w3.shape[1]          # padded output width (multiple of 128)

    # bf16 operands for the MXU; pad x's feature dim only if init_params padded w1's K
    # (large, non-128-multiple in_dim).  Under jit this fuses into a single pass.
    if in_dim_p != in_dim:
        x = jnp.pad(x, ((0, 0), (0, in_dim_p - in_dim)))
    x = x.astype(jnp.bfloat16)

    TB = _choose_tb(B, in_dim_p)
    grid = (pl.cdiv(B, TB),)      # ragged last block: OOB rows are masked on writeback

    # Weights / biases: same block every grid step -> VMEM-resident, not re-DMA'd.
    resident = lambda a: pl.BlockSpec(a.shape, lambda i: (0, 0))

    flops = 2 * B * (in_dim_p * w1.shape[1] + w2.shape[0] * w2.shape[1] + w3.shape[0] * n3_pad)
    bytes_accessed = (
        B * in_dim_p * 2 + B * n3_pad * 4
        + sum(int(a.size) * a.dtype.itemsize for a in (w1, b1, w2, b2, w3, b3)))

    out_padded = pl.pallas_call(
        three_dense_kernel,
        out_shape=jax.ShapeDtypeStruct((B, n3_pad), jnp.float32),
        grid=grid,
        in_specs=[
            pl.BlockSpec((TB, in_dim_p), lambda i: (i, 0)),   # x: tiled over batch
            resident(w1), resident(b1),
            resident(w2), resident(b2),
            resident(w3), resident(b3),
        ],
        out_specs=pl.BlockSpec((TB, n3_pad), lambda i: (i, 0)),
        compiler_params=pltpu.CompilerParams(
            dimension_semantics=("parallel",),     # shard batch tiles across v7x's 2 TCs
            vmem_limit_bytes=32 * 1024 * 1024,     # explicit: > v5e's 16 MiB default, < v7x's 64 MiB
        ),
        cost_estimate=pl.CostEstimate(
            flops=flops,
            transcendentals=B * n3_pad,            # exp per (padded) output element
            bytes_accessed=bytes_accessed,
        ),
    )(x, w1, b1, w2, b2, w3, b3)

    # Real output width is 50; the slice fuses with the consumer under jit
    # (no separate HBM read+write pass).
    return out_padded[:, :N3]


def init_params(key, input_dim):
    """PyTorch nn.Linear default init (U(-1/sqrt(fin), 1/sqrt(fin))), stored as
    (in, out) matrices.  Weights are bf16 (MXU operands), biases f32.  Hidden /
    output feature dims are zero-padded to multiples of 128; layer 1's K dim is
    padded only when in_dim is large enough that lane-dense loads pay for the
    extra (zero) HBM read."""
    real_dims = [(input_dim, N1), (N1, N2), (N2, N3)]
    params = {}
    for i, (fin, fout) in enumerate(real_dims, start=1):
        kw, kb, key = jax.random.split(key, 3)
        bound = 1.0 / float(fin) ** 0.5
        w = jax.random.uniform(kw, (fin, fout), jnp.float32, minval=-bound, maxval=bound)
        b = jax.random.uniform(kb, (1, fout), jnp.float32, minval=-bound, maxval=bound)
        if i == 1:
            fin_p = _round_up(fin, _LANE) if (fin >= 256 and fin % _LANE != 0) else fin
        else:
            fin_p = _round_up(fin, _LANE)   # matches previous layer's padded output width
        fout_p = _round_up(fout, _LANE)
        wp = jnp.zeros((fin_p, fout_p), jnp.float32).at[:fin, :fout].set(w)
        params[f"w{i}"] = wp.astype(jnp.bfloat16)
        params[f"b{i}"] = jnp.zeros((1, fout_p), jnp.float32).at[:, :fout].set(b)
    return params


if __name__ == "__main__":
    key = jax.random.PRNGKey(0)
    k_x, k_p = jax.random.split(key)

    # batch=20 exercises both the >=2-step grid (TB=16) and the ragged last block.
    batch, input_dim = 20, 32
    x = jax.random.normal(k_x, (batch, input_dim), dtype=jnp.float32)
    params = init_params(k_p, input_dim)

    out = jax.block_until_ready(three_dense_net(x, params))
    assert out.shape == (batch, N3), out.shape

    # Pure-JAX reference mirroring the kernel's bf16 operand casts (f32 accumulation).
    f32 = lambda a: a.astype(jnp.float32)
    xb = f32(x.astype(jnp.bfloat16))
    h1 = jnp.maximum(xb @ f32(params["w1"]) + params["b1"], 0.0)
    h2 = jnp.maximum(f32(h1.astype(jnp.bfloat16)) @ f32(params["w2"]) + params["b2"], 0.0)
    h3 = f32(h2.astype(jnp.bfloat16)) @ f32(params["w3"]) + params["b3"]
    ref = jax.nn.sigmoid(h3)[:, :N3]

    max_err = float(jnp.max(jnp.abs(out - ref)))
    assert jnp.allclose(out, ref, atol=2e-3, rtol=2e-3), max_err
    # Exact sigmoid keeps the range strictly within [0, 1].
    assert bool(jnp.all((out >= 0.0) & (out <= 1.0)))
    print("KERNEL_OK")
</pallas_src>

<mosaic_0001>
module attributes {stable_mosaic.version = 11 : i64} {
  func.func @three_dense_kernel(%arg0: i32, %arg1: memref<16x32xbf16, #tpu.memory_space<vmem>>, %arg2: memref<32x256xbf16, #tpu.memory_space<vmem>>, %arg3: memref<1x256xf32, #tpu.memory_space<vmem>>, %arg4: memref<256x128xbf16, #tpu.memory_space<vmem>>, %arg5: memref<1x128xf32, #tpu.memory_space<vmem>>, %arg6: memref<128x128xbf16, #tpu.memory_space<vmem>>, %arg7: memref<1x128xf32, #tpu.memory_space<vmem>>, %arg8: memref<16x128xf32, #tpu.memory_space<vmem>>) attributes {dimension_semantics = [#tpu.dimension_semantics<parallel>], iteration_bounds = array<i64: 2>, scalar_prefetch = 0 : i64, scratch_operands = 0 : i64, tpu.core_type = #tpu.core_type<tc>, window_params = [{transform_indices = @transform_0, window_bounds = array<i64: 16, 32>}, {pipeline_mode = #tpu.pipeline_mode<synchronous>, transform_indices = @transform_1, window_bounds = array<i64: 32, 256>}, {pipeline_mode = #tpu.pipeline_mode<synchronous>, transform_indices = @transform_2, window_bounds = array<i64: 1, 256>}, {pipeline_mode = #tpu.pipeline_mode<synchronous>, transform_indices = @transform_3, window_bounds = array<i64: 256, 128>}, {pipeline_mode = #tpu.pipeline_mode<synchronous>, transform_indices = @transform_4, window_bounds = array<i64: 1, 128>}, {pipeline_mode = #tpu.pipeline_mode<synchronous>, transform_indices = @transform_5, window_bounds = array<i64: 128, 128>}, {pipeline_mode = #tpu.pipeline_mode<synchronous>, transform_indices = @transform_6, window_bounds = array<i64: 1, 128>}, {transform_indices = @transform_7, window_bounds = array<i64: 16, 128>}]} {
    %c0 = arith.constant 0 : index
    %c0_0 = arith.constant 0 : index
    %0 = vector.load %arg1[%c0, %c0_0] : memref<16x32xbf16, #tpu.memory_space<vmem>>, vector<16x32xbf16>
    %c0_1 = arith.constant 0 : index
    %c0_2 = arith.constant 0 : index
    %1 = vector.load %arg2[%c0_1, %c0_2] : memref<32x256xbf16, #tpu.memory_space<vmem>>, vector<32x256xbf16>
    %cst = arith.constant dense<0.000000e+00> : vector<16x256xf32>
    %2 = tpu.matmul %0, %1, %cst {dimension_numbers = #tpu.dot_dimension_numbers<[1], [0], [0], [1], [0, 0, 1, 1], [], []>} : vector<16x32xbf16>, vector<32x256xbf16>, vector<16x256xf32> -> vector<16x256xf32>
    %c0_3 = arith.constant 0 : index
    %c0_4 = arith.constant 0 : index
    %3 = vector.load %arg3[%c0_3, %c0_4] : memref<1x256xf32, #tpu.memory_space<vmem>>, vector<1x256xf32>
    %4 = vector.broadcast %3 : vector<1x256xf32> to vector<16x256xf32>
    %5 = arith.addf %2, %4 : vector<16x256xf32>
    %cst_5 = arith.constant 0.000000e+00 : f32
    %6 = vector.broadcast %cst_5 : f32 to vector<16x256xf32>
    %7 = arith.maximumf %5, %6 : vector<16x256xf32>
    %8 = arith.truncf %7 : vector<16x256xf32> to vector<16x256xbf16>
    %c0_6 = arith.constant 0 : index
    %c0_7 = arith.constant 0 : index
    %9 = vector.load %arg4[%c0_6, %c0_7] : memref<256x128xbf16, #tpu.memory_space<vmem>>, vector<256x128xbf16>
    %cst_8 = arith.constant dense<0.000000e+00> : vector<16x128xf32>
    %10 = tpu.matmul %8, %9, %cst_8 {dimension_numbers = #tpu.dot_dimension_numbers<[1], [0], [0], [1], [0, 0, 1, 1], [], []>} : vector<16x256xbf16>, vector<256x128xbf16>, vector<16x128xf32> -> vector<16x128xf32>
    %c0_9 = arith.constant 0 : index
    %c0_10 = arith.constant 0 : index
    %11 = vector.load %arg5[%c0_9, %c0_10] : memref<1x128xf32, #tpu.memory_space<vmem>>, vector<1x128xf32>
    %12 = vector.broadcast %11 : vector<1x128xf32> to vector<16x128xf32>
    %13 = arith.addf %10, %12 : vector<16x128xf32>
    %cst_11 = arith.constant 0.000000e+00 : f32
    %14 = vector.broadcast %cst_11 : f32 to vector<16x128xf32>
    %15 = arith.maximumf %13, %14 : vector<16x128xf32>
    %16 = arith.truncf %15 : vector<16x128xf32> to vector<16x128xbf16>
    %c0_12 = arith.constant 0 : index
    %c0_13 = arith.constant 0 : index
    %17 = vector.load %arg6[%c0_12, %c0_13] : memref<128x128xbf16, #tpu.memory_space<vmem>>, vector<128x128xbf16>
    %cst_14 = arith.constant dense<0.000000e+00> : vector<16x128xf32>
    %18 = tpu.matmul %16, %17, %cst_14 {dimension_numbers = #tpu.dot_dimension_numbers<[1], [0], [0], [1], [0, 0, 1, 1], [], []>} : vector<16x128xbf16>, vector<128x128xbf16>, vector<16x128xf32> -> vector<16x128xf32>
    %c0_15 = arith.constant 0 : index
    %c0_16 = arith.constant 0 : index
    %19 = vector.load %arg7[%c0_15, %c0_16] : memref<1x128xf32, #tpu.memory_space<vmem>>, vector<1x128xf32>
    %20 = vector.broadcast %19 : vector<1x128xf32> to vector<16x128xf32>
    %21 = arith.addf %18, %20 : vector<16x128xf32>
    %cst_17 = arith.constant 0.000000e+00 : f32
    %22 = vector.broadcast %cst_17 : f32 to vector<16x128xf32>
    %23 = arith.subf %22, %21 : vector<16x128xf32>
    %24 = math.exp %23 : vector<16x128xf32>
    %cst_18 = arith.constant 1.000000e+00 : f32
    %25 = vector.broadcast %cst_18 : f32 to vector<16x128xf32>
    %26 = arith.addf %25, %24 : vector<16x128xf32>
    %cst_19 = arith.constant 1.000000e+00 : f32
    %27 = vector.broadcast %cst_19 : f32 to vector<16x128xf32>
    %28 = arith.divf %27, %26 : vector<16x128xf32>
    %c0_20 = arith.constant 0 : index
    %c0_21 = arith.constant 0 : index
    %29 = vector.load %arg8[%c0_20, %c0_21] : memref<16x128xf32, #tpu.memory_space<vmem>>, vector<16x128xf32>
    tpu.vector_store %arg8[%c0_20, %c0_21], %28 {strides = array<i32>} : memref<16x128xf32, #tpu.memory_space<vmem>>, vector<16x128xf32>,
    return
  }
  func.func @transform_0(%arg0: i32) -> (i32, i32) {
    %c0_i32 = arith.constant 0 : i32
    %c0_i32_0 = arith.constant 0 : i32
    return %arg0, %c0_i32 : i32, i32
  }
  func.func @transform_1(%arg0: i32) -> (i32, i32) {
    %c0_i32 = arith.constant 0 : i32
    %c0_i32_0 = arith.constant 0 : i32
    %c0_i32_1 = arith.constant 0 : i32
    return %c0_i32, %c0_i32_0 : i32, i32
  }
  func.func @transform_2(%arg0: i32) -> (i32, i32) {
    %c0_i32 = arith.constant 0 : i32
    %c0_i32_0 = arith.constant 0 : i32
    %c0_i32_1 = arith.constant 0 : i32
    return %c0_i32, %c0_i32_0 : i32, i32
  }
  func.func @transform_3(%arg0: i32) -> (i32, i32) {
    %c0_i32 = arith.constant 0 : i32
    %c0_i32_0 = arith.constant 0 : i32
    %c0_i32_1 = arith.constant 0 : i32
    return %c0_i32, %c0_i32_0 : i32, i32
  }
  func.func @transform_4(%arg0: i32) -> (i32, i32) {
    %c0_i32 = arith.constant 0 : i32
    %c0_i32_0 = arith.constant 0 : i32
    %c0_i32_1 = arith.constant 0 : i32
    return %c0_i32, %c0_i32_0 : i32, i32
  }
  func.func @transform_5(%arg0: i32) -> (i32, i32) {
    %c0_i32 = arith.constant 0 : i32
    %c0_i32_0 = arith.constant 0 : i32
    %c0_i32_1 = arith.constant 0 : i32
    return %c0_i32, %c0_i32_0 : i32, i32
  }
  func.func @transform_6(%arg0: i32) -> (i32, i32) {
    %c0_i32 = arith.constant 0 : i32
    %c0_i32_0 = arith.constant 0 : i32
    %c0_i32_1 = arith.constant 0 : i32
    return %c0_i32, %c0_i32_0 : i32, i32
  }
  func.func @transform_7(%arg0: i32) -> (i32, i32) {
    %c0_i32 = arith.constant 0 : i32
    %c0_i32_0 = arith.constant 0 : i32
    return %arg0, %c0_i32 : i32, i32
  }
}

</mosaic_0001>

<llo_original>
// kernel: three_dense_net.1
$region0: #{three_dense_net.1}
  #allocation0 [shape = 'u32[]', space=smem, size = 0x4, offset = 0x4, fixed_abs, tag = 'smem constant byte address 0x4 - core index']
  #allocation1 [shape = 'u32[72,128]{1,0:T(1,128)}', space=vmem, size = 0x9000, scoped, tag = 'internal scratch']
  %s0 = inlined_call_operand.vmem [shape: bf16[20,32], index: 0, kind: input, shape index: {}]
  %s1 = inlined_call_operand.vmem [shape: bf16[32,256], index: 1, kind: input, shape index: {}]
  %s2 = inlined_call_operand.vmem [shape: f32[1,256], index: 2, kind: input, shape index: {}]
  %s3 = inlined_call_operand.hbm [shape: bf16[256,128], index: 3, kind: input, shape index: {}]
  %s4 = inlined_call_operand.vmem [shape: f32[1,128], index: 4, kind: input, shape index: {}]
  %s5 = inlined_call_operand.hbm [shape: bf16[128,128], index: 5, kind: input, shape index: {}]
  %s6 = inlined_call_operand.vmem [shape: f32[1,128], index: 6, kind: input, shape index: {}]
  %s7 = inlined_call_operand.hbm [shape: f32[20,128], index: 7, kind: output, shape index: {}]
  %s8 = sld [smem:[#allocation0]]
  $region69: #{three_dense_net.1} parent=0
    _
  %s10 = ssub.s32 1, %s8
  %s11 = scalar_select 0, %s10, %s8
  $region1: #{three_dense_net.1} parent=0
    #allocation2 [shape = 'u8[65536]{0}', space=vmem, size = 0x10000, scoped, tag = 'input window, operand 3, single buffered']
    #allocation3 [shape = 's32[2]{0}', space=sflag, size = 0x8, scoped, tag = 'scoped memory for three_dense_net.1']
    #allocation4 [shape = 's32[2]{0}', space=sflag, size = 0x8, scoped, tag = 'scoped memory for three_dense_net.1']
    #allocation5 [shape = 'u8[32768]{0}', space=vmem, size = 0x8000, scoped, tag = 'input window, operand 5, single buffered']
    #allocation6 [shape = 's32[1]{0}', space=sflag, size = 0x4, scoped, tag = 'scoped memory for three_dense_net.1']
    #allocation7 [shape = 'u8[16384]{0}', space=vmem, size = 0x4000, scoped, tag = 'output window, operand 0']
    %12 = vsyncpa [#allocation3], 0
    %13 = vsyncpa [#allocation6], 0
    %14 = vsyncpa [#allocation4], 0
    %s15 = scalar_lea.sflag [#allocation4], 1
    %16 = vsyncpa %s15, 0
    loop: start=0, step=1, limit=4
    $region2: #{three_dense_net.1} parent=1 // loop_pre_header
      _
    $region3: #{three_dense_net.1} parent=1 // loop_header
      %s18 = sphi 0, %s22
      %p19 = scmp.ge.s32.totalorder %s18, 4
      %s28 = sphi 0, %s30
      %s31 = sphi 0, %s28
      %s32 = sphi 0, %s31
      %s48 = sphi 0, %s32
      %s52 = sphi 0, %s52
      %s54 = sphi 0, %s52
      %s55 = sphi 0, %s54
      %s69 = sphi 0, %s55
      %s73 = sphi 0, %s73
      %s75 = sphi 0, %s73
      %s76 = sphi 0, %s75
      %s90 = sphi 0, %s76
      %s94 = sphi 0, %s94
      %s96 = sphi 0, %s94
      %s97 = sphi 0, %s96
      %s111 = sphi 0, %s97
      %s115 = sphi 0, %s115
      %s117 = sphi 0, %s115
      %s118 = sphi 0, %s117
      %s132 = sphi 0, %s118
      %s136 = sphi 0, %s136
      %s138 = sphi 0, %s136
      %s139 = sphi 0, %s138
      %s153 = sphi 0, %s139
      %s157 = sphi 0, %s157
      %s159 = sphi 0, %s157
      %s160 = sphi 0, %s159
      %s174 = sphi 0, %s160
      %s180 = sphi 0, %s182
      %s183 = sphi 0, %s180
      %s184 = sphi 0, %s183
      %s200 = sphi 0, %s184
    $region4: #{three_dense_net.1} parent=1 // loop_header_branch
      %21 = sbr.rel (%p19) target = $region8
    $region5: #{three_dense_net.1} parent=1 // loop_body
      %s23 = ssub.s32 %s18, 1
      %s24 = ssub.s32 %s18, 2
      %s25 = sadd.s32 %s18, 1
      %s26 = ssub.s32 %s18, %s25
      %p27 = scmp.eq.s32.totalorder %s26, 0
      %s29 = sadd.s32 %s28, 1
      %s30 = scalar_select %p27, %s28, %s29
      %p33 = pneg %p27
      %p34 = scmp.eq.s32.totalorder %s18, 1
      %p35 = por %p33, %p34
      %p36 = scmp.ne.s32.totalorder %s28, %s31
      %p37 = scmp.eq.s32.totalorder %s18, 0
      %p38 = por %p36, %p37
      %p39 = scmp.ne.s32.totalorder %s28, %s31
      %p40 = scmp.eq.s32.totalorder %s23, 1
      %p41 = por %p39, %p40
      %p42 = scmp.ne.s32.totalorder %s31, %s32
      %p43 = scmp.eq.s32.totalorder %s23, 0
      %p44 = por %p42, %p43
      %p45 = scmp.ne.s32.totalorder %s31, %s32
      %p46 = scmp.eq.s32.totalorder %s24, 1
      %p47 = por %p45, %p46
      %p49 = scmp.ne.s32.totalorder %s32, %s48
      %p50 = scmp.eq.s32.totalorder %s24, 0
      %p51 = por %p49, %p50
      %s53 = sadd.s32 %s52, 1
      %p56 = scmp.eq.s32.totalorder %s18, 1
      %p57 = scmp.ne.s32.totalorder %s52, %s54
      %p58 = scmp.eq.s32.totalorder %s18, 0
      %p59 = por %p57, %p58
      %p60 = scmp.ne.s32.totalorder %s52, %s54
      %p61 = scmp.eq.s32.totalorder %s23, 1
      %p62 = por %p60, %p61
      %p63 = scmp.ne.s32.totalorder %s54, %s55
      %p64 = scmp.eq.s32.totalorder %s23, 0
      %p65 = por %p63, %p64
      %p66 = scmp.ne.s32.totalorder %s54, %s55
      %p67 = scmp.eq.s32.totalorder %s24, 1
      %p68 = por %p66, %p67
      %p70 = scmp.ne.s32.totalorder %s55, %s69
      %p71 = scmp.eq.s32.totalorder %s24, 0
      %p72 = por %p70, %p71
      %s74 = sadd.s32 %s73, 1
      %p77 = scmp.eq.s32.totalorder %s18, 1
      %p78 = scmp.ne.s32.totalorder %s73, %s75
      %p79 = scmp.eq.s32.totalorder %s18, 0
      %p80 = por %p78, %p79
      %p81 = scmp.ne.s32.totalorder %s73, %s75
      %p82 = scmp.eq.s32.totalorder %s23, 1
      %p83 = por %p81, %p82
      %p84 = scmp.ne.s32.totalorder %s75, %s76
      %p85 = scmp.eq.s32.totalorder %s23, 0
      %p86 = por %p84, %p85
      %p87 = scmp.ne.s32.totalorder %s75, %s76
      %p88 = scmp.eq.s32.totalorder %s24, 1
      %p89 = por %p87, %p88
      %p91 = scmp.ne.s32.totalorder %s76, %s90
      %p92 = scmp.eq.s32.totalorder %s24, 0
      %p93 = por %p91, %p92
      %s95 = sadd.s32 %s94, 1
      %p98 = scmp.eq.s32.totalorder %s18, 1
      %p99 = scmp.ne.s32.totalorder %s94, %s96
      %p100 = scmp.eq.s32.totalorder %s18, 0
      %p101 = por %p99, %p100
      %p102 = scmp.ne.s32.totalorder %s94, %s96
      %p103 = scmp.eq.s32.totalorder %s23, 1
      %p104 = por %p102, %p103
      %p105 = scmp.ne.s32.totalorder %s96, %s97
      %p106 = scmp.eq.s32.totalorder %s23, 0
      %p107 = por %p105, %p106
      %p108 = scmp.ne.s32.totalorder %s96, %s97
      %p109 = scmp.eq.s32.totalorder %s24, 1
      %p110 = por %p108, %p109
      %p112 = scmp.ne.s32.totalorder %s97, %s111
      %p113 = scmp.eq.s32.totalorder %s24, 0
      %p114 = por %p112, %p113
      %s116 = sadd.s32 %s115, 1
      %p119 = scmp.eq.s32.totalorder %s18, 1
      %p120 = scmp.ne.s32.totalorder %s115, %s117
      %p121 = scmp.eq.s32.totalorder %s18, 0
      %p122 = por %p120, %p121
      %p123 = scmp.ne.s32.totalorder %s115, %s117
      %p124 = scmp.eq.s32.totalorder %s23, 1
      %p125 = por %p123, %p124
      %p126 = scmp.ne.s32.totalorder %s117, %s118
      %p127 = scmp.eq.s32.totalorder %s23, 0
      %p128 = por %p126, %p127
      %p129 = scmp.ne.s32.totalorder %s117, %s118
      %p130 = scmp.eq.s32.totalorder %s24, 1
      %p131 = por %p129, %p130
      %p133 = scmp.ne.s32.totalorder %s118, %s132
      %p134 = scmp.eq.s32.totalorder %s24, 0
      %p135 = por %p133, %p134
      %s137 = sadd.s32 %s136, 1
      %p140 = scmp.eq.s32.totalorder %s18, 1
      %p141 = scmp.ne.s32.totalorder %s136, %s138
      %p142 = scmp.eq.s32.totalorder %s18, 0
      %p143 = por %p141, %p142
      %p144 = scmp.ne.s32.totalorder %s136, %s138
      %p145 = scmp.eq.s32.totalorder %s23, 1
      %p146 = por %p144, %p145
      %p147 = scmp.ne.s32.totalorder %s138, %s139
      %p148 = scmp.eq.s32.totalorder %s23, 0
      %p149 = por %p147, %p148
      %p150 = scmp.ne.s32.totalorder %s138, %s139
      %p151 = scmp.eq.s32.totalorder %s24, 1
      %p152 = por %p150, %p151
      %p154 = scmp.ne.s32.totalorder %s139, %s153
      %p155 = scmp.eq.s32.totalorder %s24, 0
      %p156 = por %p154, %p155
      %s158 = sadd.s32 %s157, 1
      %p161 = scmp.eq.s32.totalorder %s18, 1
      %p162 = scmp.ne.s32.totalorder %s157, %s159
      %p163 = scmp.eq.s32.totalorder %s18, 0
      %p164 = por %p162, %p163
      %p165 = scmp.ne.s32.totalorder %s157, %s159
      %p166 = scmp.eq.s32.totalorder %s23, 1
      %p167 = por %p165, %p166
      %p168 = scmp.ne.s32.totalorder %s159, %s160
      %p169 = scmp.eq.s32.totalorder %s23, 0
      %p170 = por %p168, %p169
      %p171 = scmp.ne.s32.totalorder %s159, %s160
      %p172 = scmp.eq.s32.totalorder %s24, 1
      %p173 = por %p171, %p172
      %p175 = scmp.ne.s32.totalorder %s160, %s174
      %p176 = scmp.eq.s32.totalorder %s24, 0
      %p177 = por %p175, %p176
      %s178 = ssub.s32 %s18, %s25
      %p179 = scmp.eq.s32.totalorder %s178, 0
      %s181 = sadd.s32 %s180, 1
      %s182 = scalar_select %p179, %s180, %s181
      %p185 = pneg %p179
      %p186 = scmp.eq.s32.totalorder %s18, 1
      %p187 = por %p185, %p186
      %p188 = scmp.ne.s32.totalorder %s180, %s183
      %p189 = scmp.eq.s32.totalorder %s18, 0
      %p190 = por %p188, %p189
      %p191 = scmp.ne.s32.totalorder %s180, %s183
      %p192 = scmp.eq.s32.totalorder %s23, 1
      %p193 = por %p191, %p192
      %p194 = scmp.ne.s32.totalorder %s183, %s184
      %p195 = scmp.eq.s32.totalorder %s23, 0
      %p196 = por %p194, %p195
      %p197 = scmp.ne.s32.totalorder %s183, %s184
      %p198 = scmp.eq.s32.totalorder %s24, 1
      %p199 = por %p197, %p198
      %p201 = scmp.ne.s32.totalorder %s184, %s200
      %p202 = scmp.eq.s32.totalorder %s24, 0
      %p203 = por %p201, %p202
      %p204 = scmp.le.s32.totalorder 1, %s18
      %p205 = scmp.lt.s32.totalorder %s18, 3
      %p206 = pnand %p204, %p205
      %p207 = pneg %p206
      // Predicated region
      $region9: #{three_dense_net.1} parent=5 // pred_check
        _
      $region10: #{three_dense_net.1} parent=5 // pred_check_branch
        %209 = sbr.rel (%p206) target = $region12
      $region11: #{three_dense_net.1} parent=5 // pred_region
        %s210 = ssub.s32 %s18, 1
        // Predicated region
        $region13: #{three_dense_net.1} parent=11 // pred_check
          %p211 = pneg %p65
        $region14: #{three_dense_net.1} parent=11 // pred_check_branch
          %213 = sbr.rel (%p211) target = $region16
        $region15: #{three_dense_net.1} parent=11 // pred_region
          _
        $region16: #{three_dense_net.1} parent=11 // pred_fallthru
          _
        // Predicated region
        $region17: #{three_dense_net.1} parent=11 // pred_check
          %p214 = pneg %p86
        $region18: #{three_dense_net.1} parent=11 // pred_check_branch
          %216 = sbr.rel (%p214) target = $region20
        $region19: #{three_dense_net.1} parent=11 // pred_region
          _
        $region20: #{three_dense_net.1} parent=11 // pred_fallthru
          _
        // Predicated region
        $region21: #{three_dense_net.1} parent=11 // pred_check
          %p217 = pneg %p107
        $region22: #{three_dense_net.1} parent=11 // pred_check_branch
          %219 = sbr.rel (%p217) target = $region24
        $region23: #{three_dense_net.1} parent=11 // pred_region
          %221 = vsyncadd [#allocation3], 0
          %s222 = sshll.u32 %s3, 4
          %s223 = int_to_ptr.hbm [resolvable:$true] %s222
          %s224 = sshll.u32 [#allocation2], 4
          %s225 = int_to_ptr.vmem [resolvable:$true] %s224
          %230 = dma.hbm_to_vmem [thread:$0]  %s223, 2048, %s225, [#allocation3], 64, 64, 4
        $region24: #{three_dense_net.1} parent=11 // pred_fallthru
          _
        // Predicated region
        $region25: #{three_dense_net.1} parent=11 // pred_check
          %p231 = pneg %p128
        $region26: #{three_dense_net.1} parent=11 // pred_check_branch
          %233 = sbr.rel (%p231) target = $region28
        $region27: #{three_dense_net.1} parent=11 // pred_region
          _
        $region28: #{three_dense_net.1} parent=11 // pred_fallthru
          _
        // Predicated region
        $region29: #{three_dense_net.1} parent=11 // pred_check
          %p234 = pneg %p149
        $region30: #{three_dense_net.1} parent=11 // pred_check_branch
          %236 = sbr.rel (%p234) target = $region32
        $region31: #{three_dense_net.1} parent=11 // pred_region
          %238 = vsyncadd [#allocation6], 0
          %s239 = sshll.u32 %s5, 4
          %s240 = int_to_ptr.hbm [resolvable:$true] %s239
          %s241 = sshll.u32 [#allocation5], 4
          %s242 = int_to_ptr.vmem [resolvable:$true] %s241
          %247 = dma.hbm_to_vmem [thread:$0]  %s240, 1024, %s242, [#allocation6], 64, 64, 4
        $region32: #{three_dense_net.1} parent=11 // pred_fallthru
          _
        // Predicated region
        $region33: #{three_dense_net.1} parent=11 // pred_check
          %p248 = pneg %p170
        $region34: #{three_dense_net.1} parent=11 // pred_check_branch
          %250 = sbr.rel (%p248) target = $region36
        $region35: #{three_dense_net.1} parent=11 // pred_region
          _
        $region36: #{three_dense_net.1} parent=11 // pred_fallthru
          _
      $region12: #{three_dense_net.1} parent=5 // pred_fallthru
        _
      %p251 = scmp.lt.s32.totalorder %s18, 2
      // Predicated region
      $region37: #{three_dense_net.1} parent=5 // pred_check
        %p252 = pneg %p251
      $region38: #{three_dense_net.1} parent=5 // pred_check_branch
        %254 = sbr.rel (%p252) target = $region40
      $region39: #{three_dense_net.1} parent=5 // pred_region
        // Predicated region
        $region41: #{three_dense_net.1} parent=39 // pred_check
          %p255 = pneg %p38
        $region42: #{three_dense_net.1} parent=39 // pred_check_branch
          %257 = sbr.rel (%p255) target = $region44
        $region43: #{three_dense_net.1} parent=39 // pred_region
          %s258 = smul.u32 2, %s18
          %s259 = ssub.s32 3, %s258
          %p260 = scmp.lt.s32.totalorder %s259, 2
          %s261 = scalar_select %p260, %s259, 2
          %s262 = smul.u32 4, %s261
          %p263 = scmp.lt.s32.totalorder %s258, 2
          %s264 = scalar_select %p263, %s258, 2
          %s265 = smul.addr %s264, 4
          %s266 = scalar_lea.vmem %s0, %s265
          %s267 = smul.u32 2, %s18
          %s268 = ssub.s32 3, %s267
          %p269 = scmp.lt.s32.totalorder %s268, 2
          %s270 = scalar_select %p269, %s268, 2
          %s271 = smul.u32 4, %s270
        $region44: #{three_dense_net.1} parent=39 // pred_fallthru
          _
      $region40: #{three_dense_net.1} parent=5 // pred_fallthru
        _
      %p272 = scmp.le.s32.totalorder 1, %s18
      %p273 = scmp.lt.s32.totalorder %s18, 3
      %p274 = pnand %p272, %p273
      %p275 = pneg %p274
      // Predicated region
      $region45: #{three_dense_net.1} parent=5 // pred_check
        _
      $region46: #{three_dense_net.1} parent=5 // pred_check_branch
        %277 = sbr.rel (%p274) target = $region48
      $region47: #{three_dense_net.1} parent=5 // pred_region
        %s278 = ssub.s32 %s18, 1
        // Predicated region
        $region49: #{three_dense_net.1} parent=47 // pred_check
          %p279 = pneg %p107
        $region50: #{three_dense_net.1} parent=47 // pred_check_branch
          %281 = sbr.rel (%p279) target = $region52
        $region51: #{three_dense_net.1} parent=47 // pred_region
          %283 = dma.done [#allocation3], 2048
        $region52: #{three_dense_net.1} parent=47 // pred_fallthru
          _
        // Predicated region
        $region53: #{three_dense_net.1} parent=47 // pred_check
          %p284 = pneg %p149
        $region54: #{three_dense_net.1} parent=47 // pred_check_branch
          %286 = sbr.rel (%p284) target = $region56
        $region55: #{three_dense_net.1} parent=47 // pred_region
          %288 = dma.done [#allocation6], 1024
        $region56: #{three_dense_net.1} parent=47 // pred_fallthru
          _
        %s289 = smul.u32 2, %s23
        %s290 = ssub.s32 3, %s289
        %p291 = scmp.lt.s32.totalorder %s290, 2
        %s292 = scalar_select %p291, %s290, 2
        %s293 = smul.u32 4, %s292
        %p294 = scmp.lt.s32.totalorder %s289, 2
        %s295 = scalar_select %p294, %s289, 2
        %s296 = smul.addr %s295, 4
        %s297 = scalar_lea.vmem %s0, %s296
        %p298 = pneg %p44
        %p299 = pneg %p41
        %p300 = pneg %p65
        %p301 = pneg %p62
        %p302 = pneg %p86
        %p303 = pneg %p83
        %p304 = pneg %p107
        %p305 = pneg %p104
        %p306 = pneg %p128
        %p307 = pneg %p125
        %p308 = pneg %p149
        %p309 = pneg %p146
        %p310 = pneg %p170
        %p311 = pneg %p167
        %p312 = pneg %p196
        %p313 = pneg %p193
        %s314 = sand.u32 %s183, 1
        %s315 = scalar_lea.sflag [#allocation4], %s314
        %s316 = sand.u32 %s183, 1
        %s317 = smul.addr %s316, 16
        %s318 = scalar_lea.vmem [#allocation7], %s317
        %s319 = smul.u32 2, %s23
        %s320 = ssub.s32 3, %s319
        %p321 = scmp.lt.s32.totalorder %s320, 2
        %s322 = scalar_select %p321, %s320, 2
        %s323 = smul.u32 4, %s322
        %p324 = scmp.lt.s32.totalorder %s319, 2
        %s325 = scalar_select %p324, %s319, 2
        %s326 = smul.addr %s325, 4
        %s327 = scalar_lea.vmem %s0, %s326
        %s328 = smul.u32 2, %s23
        %s329 = ssub.s32 3, %s328
        %p330 = scmp.lt.s32.totalorder %s329, 2
        %s331 = scalar_select %p330, %s329, 2
        %s332 = smul.u32 4, %s331
        %s333 = smul.u32 2, %s23
        %s334 = ssub.s32 3, %s333
        %p335 = scmp.lt.s32.totalorder %s334, 2
        %s336 = scalar_select %p335, %s334, 2
        %s337 = smul.u32 8, %s336
        %v339 = vld [vmem:[%s327] sm:$0xf]
        %v340 = vld [vmem:[%s327 + $0x4] sm:$0xf]
        %v341 = vld [vmem:[%s1] sm:$0xff]
        %v342 = vld [vmem:[%s1 + $0x8] sm:$0xff]
        %v343 = vld [vmem:[%s1 + $0x10] sm:$0xff]
        %v344 = vld [vmem:[%s1 + $0x18] sm:$0xff]
        %v345 = vld [vmem:[%s2] sm:$0x3]
        %v347 = vperm.slane %v345, 0
        %v348 = vperm.slane %v345, 1
        %v353 = vunpack.c.l.b16 %v339
        %v354 = vunpack.c.l.b16 %v340
        %v355 = vpack.c.b16 %v354, %v353
        %v360 = vunpack.c.l.b16 %v341
        %v361 = vunpack.c.h.b16 %v341
        %v362 = vunpack.c.l.b16 %v342
        %v363 = vunpack.c.h.b16 %v342
        %v364 = vunpack.c.l.b16 %v343
        %v365 = vunpack.c.h.b16 %v343
        %v366 = vunpack.c.l.b16 %v344
        %v367 = vunpack.c.h.b16 %v344
        %v368 = vpack.c.b16 %v362, %v360
        %v369 = vpack.c.b16 %v363, %v361
        %v370 = vpack.c.b16 %v366, %v364
        %v371 = vpack.c.b16 %v367, %v365
        %vm376 = vcmask 261120
        %v378 = vsel %vm376, %v355, 0
        %380 = vmatpush.bf16.msra.mxu0 0
        %381 = vmatpush.bf16.msra.mxu0 0
        %382 = vmatpush.bf16.msra.mxu0 0
        %383 = vmatpush.bf16.msra.mxu0 0
        %384 = vmatpush.bf16.msra.mxu0 0
        %385 = vmatpush.bf16.msra.mxu0 0
        %386 = vmatpush.bf16.msra.mxu0 %v370
        %387 = vmatpush.bf16.msra.mxu0 %v368
        %388 = vmatmul.bf16.gmra.mxu0 %v378
        %v389 = vpop.f32.mrf.mxu0
        %v390 = vadd.f32 %v347, %v389
        %v391 = vpop.f32.mrf.mxu0
        %v392 = vadd.f32 %v347, %v391
        %393 = vdwg.mxu0
        %394 = vmatpush.bf16.msra.mxu0 0
        %395 = vmatpush.bf16.msra.mxu0 0
        %396 = vmatpush.bf16.msra.mxu0 0
        %397 = vmatpush.bf16.msra.mxu0 0
        %398 = vmatpush.bf16.msra.mxu0 0
        %399 = vmatpush.bf16.msra.mxu0 0
        %400 = vmatpush.bf16.msra.mxu0 %v371
        %401 = vmatpush.bf16.msra.mxu0 %v369
        %402 = vmatmul.bf16.gmra.mxu0 %v378
        %v403 = vpop.f32.mrf.mxu0
        %v404 = vadd.f32 %v348, %v403
        %v405 = vpop.f32.mrf.mxu0
        %v406 = vadd.f32 %v348, %v405
        %407 = vdwg.mxu0
        %v408 = vmax.f32 %v390, 0.0
        %v409 = vmax.f32 %v404, 0.0
        %v410 = vmax.f32 %v392, 0.0
        %v411 = vmax.f32 %v406, 0.0
        %v412 = vpack.c.bf16 %v410, %v408
        %v413 = vpack.c.bf16 %v411, %v409
        %v414 = vld [vmem:[#allocation2] sm:$0xf]
        %v415 = vld [vmem:[#allocation2 + $0x4] sm:$0xf]
        %v416 = vld [vmem:[#allocation2 + $0x8] sm:$0xf]
        %v417 = vld [vmem:[#allocation2 + $0xc] sm:$0xf]
        %v418 = vld [vmem:[#allocation2 + $0x10] sm:$0xf]
        %v419 = vld [vmem:[#allocation2 + $0x14] sm:$0xf]
        %v420 = vld [vmem:[#allocation2 + $0x18] sm:$0xf]
        %v421 = vld [vmem:[#allocation2 + $0x1c] sm:$0xf]
        %v422 = vld [vmem:[#allocation2 + $0x20] sm:$0xf]
        %v423 = vld [vmem:[#allocation2 + $0x24] sm:$0xf]
        %v424 = vld [vmem:[#allocation2 + $0x28] sm:$0xf]
        %v425 = vld [vmem:[#allocation2 + $0x2c] sm:$0xf]
        %v426 = vld [vmem:[#allocation2 + $0x30] sm:$0xf]
        %v427 = vld [vmem:[#allocation2 + $0x34] sm:$0xf]
        %v428 = vld [vmem:[#allocation2 + $0x38] sm:$0xf]
        %v429 = vld [vmem:[#allocation2 + $0x3c] sm:$0xf]
        %v430 = vld [vmem:[#allocation2 + $0x40] sm:$0xf]
        %v431 = vld [vmem:[#allocation2 + $0x44] sm:$0xf]
        %v432 = vld [vmem:[#allocation2 + $0x48] sm:$0xf]
        %v433 = vld [vmem:[#allocation2 + $0x4c] sm:$0xf]
        %v434 = vld [vmem:[#allocation2 + $0x50] sm:$0xf]
        %v435 = vld [vmem:[#allocation2 + $0x54] sm:$0xf]
        %v436 = vld [vmem:[#allocation2 + $0x58] sm:$0xf]
        %v437 = vld [vmem:[#allocation2 + $0x5c] sm:$0xf]
        %v438 = vld [vmem:[#allocation2 + $0x60] sm:$0xf]
        %v439 = vld [vmem:[#allocation2 + $0x64] sm:$0xf]
        %v440 = vld [vmem:[#allocation2 + $0x68] sm:$0xf]
        %v441 = vld [vmem:[#allocation2 + $0x6c] sm:$0xf]
        %v442 = vld [vmem:[#allocation2 + $0x70] sm:$0xf]
        %v443 = vld [vmem:[#allocation2 + $0x74] sm:$0xf]
        %v444 = vld [vmem:[#allocation2 + $0x78] sm:$0xf]
        %v445 = vld [vmem:[#allocation2 + $0x7c] sm:$0xf]
        %v446 = vld [vmem:[%s4] sm:$0x1]
        %v448 = vperm.slane %v446, 0
        %v482 = vunpack.c.l.b16 %v414
        %v483 = vunpack.c.l.b16 %v415
        %v484 = vunpack.c.l.b16 %v416
        %v485 = vunpack.c.l.b16 %v417
        %v486 = vunpack.c.l.b16 %v418
        %v487 = vunpack.c.l.b16 %v419
        %v488 = vunpack.c.l.b16 %v420
        %v489 = vunpack.c.l.b16 %v421
        %v490 = vunpack.c.l.b16 %v422
        %v491 = vunpack.c.l.b16 %v423
        %v492 = vunpack.c.l.b16 %v424
        %v493 = vunpack.c.l.b16 %v425
        %v494 = vunpack.c.l.b16 %v426
        %v495 = vunpack.c.l.b16 %v427
        %v496 = vunpack.c.l.b16 %v428
        %v497 = vunpack.c.l.b16 %v429
        %v498 = vunpack.c.l.b16 %v430
        %v499 = vunpack.c.l.b16 %v431
        %v500 = vunpack.c.l.b16 %v432
        %v501 = vunpack.c.l.b16 %v433
        %v502 = vunpack.c.l.b16 %v434
        %v503 = vunpack.c.l.b16 %v435
        %v504 = vunpack.c.l.b16 %v436
        %v505 = vunpack.c.l.b16 %v437
        %v506 = vunpack.c.l.b16 %v438
        %v507 = vunpack.c.l.b16 %v439
        %v508 = vunpack.c.l.b16 %v440
        %v509 = vunpack.c.l.b16 %v441
        %v510 = vunpack.c.l.b16 %v442
        %v511 = vunpack.c.l.b16 %v443
        %v512 = vunpack.c.l.b16 %v444
        %v513 = vunpack.c.l.b16 %v445
        %v514 = vpack.c.b16 %v483, %v482
        %v515 = vpack.c.b16 %v485, %v484
        %v516 = vpack.c.b16 %v487, %v486
        %v517 = vpack.c.b16 %v489, %v488
        %v518 = vpack.c.b16 %v491, %v490
        %v519 = vpack.c.b16 %v493, %v492
        %v520 = vpack.c.b16 %v495, %v494
        %v521 = vpack.c.b16 %v497, %v496
        %v522 = vpack.c.b16 %v499, %v498
        %v523 = vpack.c.b16 %v501, %v500
        %v524 = vpack.c.b16 %v503, %v502
        %v525 = vpack.c.b16 %v505, %v504
        %v526 = vpack.c.b16 %v507, %v506
        %v527 = vpack.c.b16 %v509, %v508
        %v528 = vpack.c.b16 %v511, %v510
        %v529 = vpack.c.b16 %v513, %v512
        %546 = vmatpush.bf16.msra.mxu0 %v521
        %547 = vmatpush.bf16.msra.mxu0 %v520
        %548 = vmatpush.bf16.msra.mxu0 %v519
        %549 = vmatpush.bf16.msra.mxu0 %v518
        %550 = vmatpush.bf16.msra.mxu0 %v517
        %551 = vmatpush.bf16.msra.mxu0 %v516
        %552 = vmatpush.bf16.msra.mxu0 %v515
        %553 = vmatpush.bf16.msra.mxu0 %v514
        %554 = vmatmul.bf16.gmra.mxu0 %v412
        %v555 = vpop.f32.mrf.mxu0
        %v556 = vadd.f32 %v448, %v555
        %v557 = vpop.f32.mrf.mxu0
        %v558 = vadd.f32 %v448, %v557
        %559 = vdwg.mxu0
        %560 = vmatpush.bf16.msra.mxu0 %v529
        %561 = vmatpush.bf16.msra.mxu0 %v528
        %562 = vmatpush.bf16.msra.mxu0 %v527
        %563 = vmatpush.bf16.msra.mxu0 %v526
        %564 = vmatpush.bf16.msra.mxu0 %v525
        %565 = vmatpush.bf16.msra.mxu0 %v524
        %566 = vmatpush.bf16.msra.mxu0 %v523
        %567 = vmatpush.bf16.msra.mxu0 %v522
        %568 = vmatmul.bf16.gmra.mxu0 %v413
        %v569 = vpop.f32.mrf.mxu0
        %v570 = vadd.f32 %v556, %v569
        %v571 = vpop.f32.mrf.mxu0
        %v572 = vadd.f32 %v558, %v571
        %573 = vdwg.mxu0
        %v574 = vmax.f32 %v570, 0.0
        %v575 = vmax.f32 %v572, 0.0
        %v576 = vpack.c.bf16 %v575, %v574
        %v577 = vld [vmem:[#allocation5] sm:$0xf]
        %v578 = vld [vmem:[#allocation5 + $0x4] sm:$0xf]
        %v579 = vld [vmem:[#allocation5 + $0x8] sm:$0xf]
        %v580 = vld [vmem:[#allocation5 + $0xc] sm:$0xf]
        %v581 = vld [vmem:[#allocation5 + $0x10] sm:$0xf]
        %v582 = vld [vmem:[#allocation5 + $0x14] sm:$0xf]
        %v583 = vld [vmem:[#allocation5 + $0x18] sm:$0xf]
        %v584 = vld [vmem:[#allocation5 + $0x1c] sm:$0xf]
        %v585 = vld [vmem:[#allocation5 + $0x20] sm:$0xf]
        %v586 = vld [vmem:[#allocation5 + $0x24] sm:$0xf]
        %v587 = vld [vmem:[#allocation5 + $0x28] sm:$0xf]
        %v588 = vld [vmem:[#allocation5 + $0x2c] sm:$0xf]
        %v589 = vld [vmem:[#allocation5 + $0x30] sm:$0xf]
        %v590 = vld [vmem:[#allocation5 + $0x34] sm:$0xf]
        %v591 = vld [vmem:[#allocation5 + $0x38] sm:$0xf]
        %v592 = vld [vmem:[#allocation5 + $0x3c] sm:$0xf]
        %v593 = vld [vmem:[%s6] sm:$0x1]
        %v595 = vperm.slane %v593, 0
        %v613 = vunpack.c.l.b16 %v577
        %v614 = vunpack.c.l.b16 %v578
        %v615 = vunpack.c.l.b16 %v579
        %v616 = vunpack.c.l.b16 %v580
        %v617 = vunpack.c.l.b16 %v581
        %v618 = vunpack.c.l.b16 %v582
        %v619 = vunpack.c.l.b16 %v583
        %v620 = vunpack.c.l.b16 %v584
        %v621 = vunpack.c.l.b16 %v585
        %v622 = vunpack.c.l.b16 %v586
        %v623 = vunpack.c.l.b16 %v587
        %v624 = vunpack.c.l.b16 %v588
        %v625 = vunpack.c.l.b16 %v589
        %v626 = vunpack.c.l.b16 %v590
        %v627 = vunpack.c.l.b16 %v591
        %v628 = vunpack.c.l.b16 %v592
        %v629 = vpack.c.b16 %v614, %v613
        %v630 = vpack.c.b16 %v616, %v615
        %v631 = vpack.c.b16 %v618, %v617
        %v632 = vpack.c.b16 %v620, %v619
        %v633 = vpack.c.b16 %v622, %v621
        %v634 = vpack.c.b16 %v624, %v623
        %v635 = vpack.c.b16 %v626, %v625
        %v636 = vpack.c.b16 %v628, %v627
        %645 = vmatpush.bf16.msra.mxu0 %v636
        %646 = vmatpush.bf16.msra.mxu0 %v635
        %647 = vmatpush.bf16.msra.mxu0 %v634
        %648 = vmatpush.bf16.msra.mxu0 %v633
        %649 = vmatpush.bf16.msra.mxu0 %v632
        %650 = vmatpush.bf16.msra.mxu0 %v631
        %651 = vmatpush.bf16.msra.mxu0 %v630
        %652 = vmatpush.bf16.msra.mxu0 %v629
        %653 = vmatmul.bf16.gmra.mxu0 %v576
        %v654 = vpop.f32.mrf.mxu0
        %v655 = vadd.f32 %v595, %v654
        %v656 = vpop.f32.mrf.mxu0
        %v657 = vadd.f32 %v595, %v656
        %658 = vdwg.mxu0
        %v659 = vsub.f32 0.0, %v655
        %v660 = vsub.f32 0.0, %v657
        %v661 = vmul.f32 %v659, 1.442695
        %v662 = vpow.pop %v661
        %v663 = vmul.f32 %v660, 1.442695
        %v664 = vpow.pop %v663
        %v665 = vadd.f32 %v662, 1.0
        %v666 = vadd.f32 %v664, 1.0
        %v667 = vrcp.pop %v665
        %v668 = vmul.f32 %v665, %v667
        %v669 = vsub.f32 1.0, %v668
        %v670 = vmul.f32 %v667, %v669
        %v671 = vadd.f32 %v667, %v670
        %vm672 = vweird.f32 %v665
        %vm673 = vweird.f32 %v667
        %vm674 = vmor %vm672, %vm673
        %v675 = vsel %vm674, %v667, %v671
        %v676 = vand.u32 2147483647, %v665
        %vm677 = vcmp.eq.f32.partialorder %v676, 8.507059e+37
        %v678 = vand.u32 %v665, 2147483648
        %v679 = vor.u32 1.1754944e-38, %v678
        %v680 = vsel %vm677, %v679, %v675
        %v681 = vmul.f32 1.0, %v680
        %v682 = vrcp.pop %v666
        %v683 = vmul.f32 %v666, %v682
        %v684 = vsub.f32 1.0, %v683
        %v685 = vmul.f32 %v682, %v684
        %v686 = vadd.f32 %v682, %v685
        %vm687 = vweird.f32 %v666
        %vm688 = vweird.f32 %v682
        %vm689 = vmor %vm687, %vm688
        %v690 = vsel %vm689, %v682, %v686
        %v691 = vand.u32 2147483647, %v666
        %vm692 = vcmp.eq.f32.partialorder %v691, 8.507059e+37
        %v693 = vand.u32 %v666, 2147483648
        %v694 = vor.u32 1.1754944e-38, %v693
        %v695 = vsel %vm692, %v694, %v690
        %v696 = vmul.f32 1.0, %v695
        %697 = vst [vmem:[%s318] sm:$0xff] %v681
        %698 = vst [vmem:[%s318 + $0x8] sm:$0xff] %v696
        %s699 = sand.u32 %s183, 1
        %s700 = scalar_lea.sflag [#allocation4], %s699
        %s701 = sand.u32 %s183, 1
        %s702 = smul.addr %s701, 16
        %s703 = scalar_lea.vmem [#allocation7], %s702
        // Predicated region
        $region57: #{three_dense_net.1} parent=47 // pred_check
          %p704 = pneg %p193
        $region58: #{three_dense_net.1} parent=47 // pred_check_branch
          %706 = sbr.rel (%p704) target = $region60
        $region59: #{three_dense_net.1} parent=47 // pred_region
          %s707 = smul.u32 2, %s23
          %s708 = ssub.s32 3, %s707
          %p709 = scmp.lt.s32.totalorder %s708, 2
          %s710 = scalar_select %p709, %s708, 2
          %s711 = smul.u32 8, %s710
          %s712 = ssub.s32 16, %s711
          %s713 = sshll.u32 %s712, 4
          %714 = vsyncadd %s700, %s713
          %p715 = scmp.ne.s32.totalorder 0, %s711
          %s716 = smul.addr %s707, 8
          %s717 = scalar_lea.hbm %s7, %s716
          %s718 = smul.u32 8, %s710
          %s719 = sshll.u32 %s703, 4
          %s720 = int_to_ptr.vmem [resolvable:$true] %s719
          %s721 = sshll.u32 %s717, 4
          %s722 = int_to_ptr.hbm [resolvable:$true] %s721
          %s723 = sshll.u32 %s718, 4
          %727 = dma.vmem_to_hbm [thread:$0]  (%p715), %s720, %s723, %s722, %s700, 128, 128, 8
        $region60: #{three_dense_net.1} parent=47 // pred_fallthru
          _
      $region48: #{three_dense_net.1} parent=5 // pred_fallthru
        _
      %p728 = scmp.le.s32.totalorder 2, %s18
      // Predicated region
      $region61: #{three_dense_net.1} parent=5 // pred_check
        %p729 = pneg %p728
      $region62: #{three_dense_net.1} parent=5 // pred_check_branch
        %731 = sbr.rel (%p729) target = $region64
      $region63: #{three_dense_net.1} parent=5 // pred_region
        %s732 = ssub.s32 %s18, 2
        // Predicated region
        $region65: #{three_dense_net.1} parent=63 // pred_check
          %p733 = pneg %p199
        $region66: #{three_dense_net.1} parent=63 // pred_check_branch
          %735 = sbr.rel (%p733) target = $region68
        $region67: #{three_dense_net.1} parent=63 // pred_region
          %s736 = sand.u32 %s184, 1
          %s737 = scalar_lea.sflag [#allocation4], %s736
          %s738 = sand.u32 %s184, 1
          %s739 = smul.addr %s738, 16
          %s740 = scalar_lea.vmem [#allocation7], %s739
          %742 = dma.done %s737, 256
        $region68: #{three_dense_net.1} parent=63 // pred_fallthru
          _
      $region64: #{three_dense_net.1} parent=5 // pred_fallthru
        _
    $region6: #{three_dense_net.1} parent=1 // loop_footer
      %s22 = sadd.s32 1, %s18
    $region7: #{three_dense_net.1} parent=1 // loop_footer_branch
      %17 = sbr.rel target = $region3
    $region8: #{three_dense_net.1} parent=1 // loop_exit
      _
    %743 = vsyncpa [#allocation3], 1
    %s744 = scalar_lea.sflag [#allocation3], 1
    %745 = vsyncpa %s744, 1
    %746 = vsyncpa [#allocation6], 1
    %747 = vsyncpa [#allocation4], 1
    %s748 = scalar_lea.sflag [#allocation4], 1
    %749 = vsyncpa %s748, 1

</llo_original>
